<compile_context>
chip_gen: v6e
topology: v6e:2x2x1
jax: 0.10.0
libtpu: 0.0.40
codegen_flags: <defaults>
</compile_context>

<pallas_src>
import jax
import jax.numpy as jnp
from jax import lax
from jax.experimental import pallas as pl
from jax.experimental.pallas import tpu as pltpu


def conv_block_forward(x, weight, bias, gamma, beta, run_mean, run_var,
                       *, w, s, d, eps=1e-5):
    """Pallas implementation of ConvBlock.forward (eval mode).

    x      : (N, C_in, H, W)  float32 (NCHW, as PyTorch)
    weight : (F, C_in, w, 1)  float32 (PyTorch Conv2d layout)
    bias, gamma, beta, run_mean, run_var : (F,)
    returns: (N, F, H_pool, W)
    """
    N, Cin, H, Wsp = x.shape
    F = weight.shape[0]

    p1 = d * (w - 1) // 2
    p2 = d * (w - 1) - p1
    H_pad = H + p1 + p2
    H_conv = (H_pad - (d * (w - 1) + 1)) // s + 1
    H_pool = H_conv // 2
    assert H_pool >= 1

    HW = H * Wsp                # input lane axis
    M_conv = H_conv * Wsp       # conv-output lane axis
    M_out = H_pool * Wsp        # pooled-output lane axis

    # ---- wrapper glue (all tiny or copy-free) ------------------------------
    x_flat = x.reshape(N, Cin, HW)                          # trailing merge: no copy
    # (F, Cin, w, 1) -> (F, w, Cin) -> (F, w*Cin) ; k = t*Cin + c
    wmat = jnp.transpose(weight[..., 0], (0, 2, 1)).reshape(F, w * Cin)
    wmat = wmat.astype(jnp.float32)
    scale = gamma / jnp.sqrt(run_var + eps)                 # eval-mode BN fold
    shift = beta - run_mean * scale
    params = jnp.stack([bias, scale, shift], axis=1).astype(jnp.float32)  # (F, 3)

    # ---- VMEM-aware image tile --------------------------------------------
    # bytes per image in flight: double-buffered in/out blocks + fp32 temps
    per_img = (2 * (Cin * HW + F * M_out)
               + (w * Cin) * M_conv + 4 * F * M_conv) * 4
    budget = 12 * 2 ** 20       # conservative: fits v5e/v6e/v7x scoped VMEM
    n_tile = 1
    for cand in range(1, min(N, 8) + 1):
        if N % cand:
            continue
        if N >= 2 and N // cand < 2:     # keep >=2 grid steps (v7x megacore)
            continue
        if cand * per_img <= budget:
            n_tile = cand
    grid = (N // n_tile,)
    vmem_limit = int(min(32 << 20, max(16 << 20, 2 * n_tile * per_img + (2 << 20))))

    # ---- Pallas kernel: im2col conv + bias + relu + bn-affine + maxpool ----
    def kernel(x_ref, w_ref, p_ref, o_ref):
        wv = w_ref[...]                         # (F, w*Cin) fp32
        b_ = p_ref[:, 0:1]                      # (F, 1) conv bias
        sc = p_ref[:, 1:2]                      # (F, 1) BN scale
        sh = p_ref[:, 2:3]                      # (F, 1) BN shift

        for i in range(n_tile):                 # static unroll over images
            xi = x_ref[i].astype(jnp.float32)   # (Cin, H*W), lanes = H*W

            # im2col: per tap, a lane-slice of the flattened (H, W) axis with
            # zero fill for the virtual H padding; stacked along contraction.
            taps = []
            if s == 1:
                for t in range(w):
                    lo = t * d - p1
                    hi = lo + H_conv
                    lo_c, hi_c = max(0, lo), min(H, hi)
                    zb, za = max(0, -lo), max(0, hi - H)
                    pieces = []
                    if zb:
                        pieces.append(jnp.zeros((Cin, zb * Wsp), jnp.float32))
                    if hi_c > lo_c:
                        pieces.append(xi[:, lo_c * Wsp:hi_c * Wsp])
                    if za:
                        pieces.append(jnp.zeros((Cin, za * Wsp), jnp.float32))
                    taps.append(pieces[0] if len(pieces) == 1
                                else jnp.concatenate(pieces, axis=-1))
            else:
                # strided-H path: gather the needed rows (W-wide lane chunks)
                for t in range(w):
                    rows = []
                    for h in range(H_conv):
                        r = h * s + t * d - p1
                        if 0 <= r < H:
                            rows.append(xi[:, r * Wsp:(r + 1) * Wsp])
                        else:
                            rows.append(jnp.zeros((Cin, Wsp), jnp.float32))
                    taps.append(rows[0] if len(rows) == 1
                                else jnp.concatenate(rows, axis=-1))

            xcol = taps[0] if len(taps) == 1 else jnp.concatenate(taps, axis=0)
            # single MXU push: (F, w*Cin) @ (w*Cin, H_conv*W)
            y = jnp.dot(wv, xcol, preferred_element_type=jnp.float32)
            y = jnp.maximum(y + b_, 0.0)        # conv bias + ReLU
            y = y * sc + sh                     # BatchNorm (eval, folded)

            # MaxPool2d((2,1)) along H (floor: drop trailing odd row); pairs
            # of H rows are adjacent W-wide lane chunks -> slice + max + concat
            parts = [jnp.maximum(y[:, (2 * j) * Wsp:(2 * j + 1) * Wsp],
                                 y[:, (2 * j + 1) * Wsp:(2 * j + 2) * Wsp])
                     for j in range(H_pool)]
            pooled = parts[0] if H_pool == 1 else jnp.concatenate(parts, axis=-1)
            o_ref[i] = pooled.astype(o_ref.dtype)
            # Dropout(0.25): identity in eval mode.

    out = pl.pallas_call(
        kernel,
        out_shape=jax.ShapeDtypeStruct((N, F, M_out), x.dtype),
        grid_spec=pltpu.PrefetchScalarGridSpec(
            num_scalar_prefetch=0,
            grid=grid,
            in_specs=[
                pl.BlockSpec((n_tile, Cin, HW), lambda i: (i, 0, 0)),
                pl.BlockSpec((F, w * Cin), lambda i: (0, 0)),
                pl.BlockSpec((F, 3), lambda i: (0, 0)),
            ],
            out_specs=pl.BlockSpec((n_tile, F, M_out), lambda i: (i, 0, 0)),
        ),
        compiler_params=pltpu.CompilerParams(
            dimension_semantics=("parallel",),
            vmem_limit_bytes=vmem_limit),
    )(x_flat, wmat, params)

    # (N, F, H_pool*W) -> (N, F, H_pool, W): trailing-dim split, no copy.
    return out.reshape(N, F, H_pool, Wsp)


def reference_forward(x, weight, bias, gamma, beta, run_mean, run_var,
                      *, w, s, d, eps=1e-5):
    """Plain-JAX reference matching PyTorch eval-mode ConvBlock.forward."""
    p1 = d * (w - 1) // 2
    p2 = d * (w - 1) - p1
    y = lax.conv_general_dilated(
        x, weight, window_strides=(s, 1), padding=((p1, p2), (0, 0)),
        rhs_dilation=(d, 1), dimension_numbers=("NCHW", "OIHW", "NCHW"))
    y = y + bias.reshape(1, -1, 1, 1)
    y = jnp.maximum(y, 0.0)
    scale = gamma / jnp.sqrt(run_var + eps)
    shift = beta - run_mean * scale
    y = y * scale.reshape(1, -1, 1, 1) + shift.reshape(1, -1, 1, 1)
    Nn, Ff, Hc, Ww = y.shape
    Hp = Hc // 2
    y = y[:, :, :2 * Hp, :].reshape(Nn, Ff, Hp, 2, Ww).max(axis=3)
    return y


if __name__ == "__main__":
    key = jax.random.PRNGKey(0)
    keys = jax.random.split(key, 7)

    # ConvBlock(f=8, w=3, s=1, d=1, in_channels=4); x: (N=2, C=4, H=16, W=16)
    N, Cin, H, Wsp = 2, 4, 16, 16
    f, w, s, d = 8, 3, 1, 1

    x = jax.random.normal(keys[0], (N, Cin, H, Wsp), jnp.float32)
    weight = jax.random.normal(keys[1], (f, Cin, w, 1), jnp.float32) * 0.1
    bias = jax.random.normal(keys[2], (f,), jnp.float32) * 0.1
    gamma = jax.random.uniform(keys[3], (f,), jnp.float32, 0.5, 1.5)
    beta = jax.random.normal(keys[4], (f,), jnp.float32) * 0.1
    run_mean = jax.random.normal(keys[5], (f,), jnp.float32) * 0.1
    run_var = jax.random.uniform(keys[6], (f,), jnp.float32, 0.5, 1.5)

    out = conv_block_forward(x, weight, bias, gamma, beta, run_mean, run_var,
                             w=w, s=s, d=d)
    out = jax.block_until_ready(out)

    ref = reference_forward(x, weight, bias, gamma, beta, run_mean, run_var,
                            w=w, s=s, d=d)
    assert out.shape == ref.shape, (out.shape, ref.shape)
    assert jnp.allclose(out, ref, atol=1e-4, rtol=1e-4), float(
        jnp.max(jnp.abs(out - ref)))

    print("KERNEL_OK")
</pallas_src>

<mosaic_0001>
module attributes {stable_mosaic.version = 11 : i64} {
  func.func @kernel(%arg0: i32, %arg1: memref<1x4x256xf32, #tpu.memory_space<vmem>>, %arg2: memref<8x12xf32, #tpu.memory_space<vmem>>, %arg3: memref<8x3xf32, #tpu.memory_space<vmem>>, %arg4: memref<1x8x128xf32, #tpu.memory_space<vmem>>) attributes {dimension_semantics = [#tpu.dimension_semantics<parallel>], iteration_bounds = array<i64: 2>, scalar_prefetch = 0 : i64, scratch_operands = 0 : i64, tpu.core_type = #tpu.core_type<tc>, window_params = [{transform_indices = @transform_0, window_bounds = array<i64: 1, 4, 256>}, {pipeline_mode = #tpu.pipeline_mode<synchronous>, transform_indices = @transform_1, window_bounds = array<i64: 8, 12>}, {pipeline_mode = #tpu.pipeline_mode<synchronous>, transform_indices = @transform_2, window_bounds = array<i64: 8, 3>}, {transform_indices = @transform_3, window_bounds = array<i64: 1, 8, 128>}]} {
    %c0 = arith.constant 0 : index
    %c0_0 = arith.constant 0 : index
    %0 = vector.load %arg2[%c0, %c0_0] : memref<8x12xf32, #tpu.memory_space<vmem>>, vector<8x12xf32>
    %c0_1 = arith.constant 0 : index
    %c0_2 = arith.constant 0 : index
    %1 = vector.load %arg3[%c0_1, %c0_2] : memref<8x3xf32, #tpu.memory_space<vmem>>, vector<8x1xf32>
    %c0_3 = arith.constant 0 : index
    %c1 = arith.constant 1 : index
    %2 = vector.load %arg3[%c0_3, %c1] : memref<8x3xf32, #tpu.memory_space<vmem>>, vector<8x1xf32>
    %c0_4 = arith.constant 0 : index
    %c2 = arith.constant 2 : index
    %3 = vector.load %arg3[%c0_4, %c2] : memref<8x3xf32, #tpu.memory_space<vmem>>, vector<8x1xf32>
    %c0_5 = arith.constant 0 : index
    %c0_6 = arith.constant 0 : index
    %c0_7 = arith.constant 0 : index
    %4 = vector.load %arg1[%c0_5, %c0_6, %c0_7] : memref<1x4x256xf32, #tpu.memory_space<vmem>>, vector<1x4x256xf32>
    %5 = vector.shape_cast %4 : vector<1x4x256xf32> to vector<4x256xf32>
    %cst = arith.constant 0.000000e+00 : f32
    %6 = vector.broadcast %cst : f32 to vector<4x16xf32>
    %7 = vector.extract_strided_slice %5 {offsets = [0, 0], sizes = [4, 240], strides = [1, 1]} : vector<4x256xf32> to vector<4x240xf32>
    %8 = tpu.concatenate %6, %7 in 1 : vector<4x16xf32>, vector<4x240xf32> -> vector<4x256xf32>
    %9 = vector.extract_strided_slice %5 {offsets = [0, 16], sizes = [4, 240], strides = [1, 1]} : vector<4x256xf32> to vector<4x240xf32>
    %cst_8 = arith.constant 0.000000e+00 : f32
    %10 = vector.broadcast %cst_8 : f32 to vector<4x16xf32>
    %11 = tpu.concatenate %9, %10 in 1 : vector<4x240xf32>, vector<4x16xf32> -> vector<4x256xf32>
    %12 = tpu.concatenate %8, %5, %11 in 0 : vector<4x256xf32>, vector<4x256xf32>, vector<4x256xf32> -> vector<12x256xf32>
    %cst_9 = arith.constant dense<0.000000e+00> : vector<8x256xf32>
    %13 = tpu.matmul %0, %12, %cst_9 {dimension_numbers = #tpu.dot_dimension_numbers<[1], [0], [0], [1], [0, 0, 1, 1], [], []>} : vector<8x12xf32>, vector<12x256xf32>, vector<8x256xf32> -> vector<8x256xf32>
    %14 = vector.broadcast %1 : vector<8x1xf32> to vector<8x256xf32>
    %15 = arith.addf %13, %14 : vector<8x256xf32>
    %cst_10 = arith.constant 0.000000e+00 : f32
    %16 = vector.broadcast %cst_10 : f32 to vector<8x256xf32>
    %17 = arith.maximumf %15, %16 : vector<8x256xf32>
    %18 = vector.broadcast %2 : vector<8x1xf32> to vector<8x256xf32>
    %19 = arith.mulf %17, %18 : vector<8x256xf32>
    %20 = vector.broadcast %3 : vector<8x1xf32> to vector<8x256xf32>
    %21 = arith.addf %19, %20 : vector<8x256xf32>
    %22 = vector.extract_strided_slice %21 {offsets = [0, 0], sizes = [8, 16], strides = [1, 1]} : vector<8x256xf32> to vector<8x16xf32>
    %23 = vector.extract_strided_slice %21 {offsets = [0, 16], sizes = [8, 16], strides = [1, 1]} : vector<8x256xf32> to vector<8x16xf32>
    %24 = arith.maximumf %22, %23 : vector<8x16xf32>
    %25 = vector.extract_strided_slice %21 {offsets = [0, 32], sizes = [8, 16], strides = [1, 1]} : vector<8x256xf32> to vector<8x16xf32>
    %26 = vector.extract_strided_slice %21 {offsets = [0, 48], sizes = [8, 16], strides = [1, 1]} : vector<8x256xf32> to vector<8x16xf32>
    %27 = arith.maximumf %25, %26 : vector<8x16xf32>
    %28 = vector.extract_strided_slice %21 {offsets = [0, 64], sizes = [8, 16], strides = [1, 1]} : vector<8x256xf32> to vector<8x16xf32>
    %29 = vector.extract_strided_slice %21 {offsets = [0, 80], sizes = [8, 16], strides = [1, 1]} : vector<8x256xf32> to vector<8x16xf32>
    %30 = arith.maximumf %28, %29 : vector<8x16xf32>
    %31 = vector.extract_strided_slice %21 {offsets = [0, 96], sizes = [8, 16], strides = [1, 1]} : vector<8x256xf32> to vector<8x16xf32>
    %32 = vector.extract_strided_slice %21 {offsets = [0, 112], sizes = [8, 16], strides = [1, 1]} : vector<8x256xf32> to vector<8x16xf32>
    %33 = arith.maximumf %31, %32 : vector<8x16xf32>
    %34 = vector.extract_strided_slice %21 {offsets = [0, 128], sizes = [8, 16], strides = [1, 1]} : vector<8x256xf32> to vector<8x16xf32>
    %35 = vector.extract_strided_slice %21 {offsets = [0, 144], sizes = [8, 16], strides = [1, 1]} : vector<8x256xf32> to vector<8x16xf32>
    %36 = arith.maximumf %34, %35 : vector<8x16xf32>
    %37 = vector.extract_strided_slice %21 {offsets = [0, 160], sizes = [8, 16], strides = [1, 1]} : vector<8x256xf32> to vector<8x16xf32>
    %38 = vector.extract_strided_slice %21 {offsets = [0, 176], sizes = [8, 16], strides = [1, 1]} : vector<8x256xf32> to vector<8x16xf32>
    %39 = arith.maximumf %37, %38 : vector<8x16xf32>
    %40 = vector.extract_strided_slice %21 {offsets = [0, 192], sizes = [8, 16], strides = [1, 1]} : vector<8x256xf32> to vector<8x16xf32>
    %41 = vector.extract_strided_slice %21 {offsets = [0, 208], sizes = [8, 16], strides = [1, 1]} : vector<8x256xf32> to vector<8x16xf32>
    %42 = arith.maximumf %40, %41 : vector<8x16xf32>
    %43 = vector.extract_strided_slice %21 {offsets = [0, 224], sizes = [8, 16], strides = [1, 1]} : vector<8x256xf32> to vector<8x16xf32>
    %44 = vector.extract_strided_slice %21 {offsets = [0, 240], sizes = [8, 16], strides = [1, 1]} : vector<8x256xf32> to vector<8x16xf32>
    %45 = arith.maximumf %43, %44 : vector<8x16xf32>
    %46 = tpu.concatenate %24, %27, %30, %33, %36, %39, %42, %45 in 1 : vector<8x16xf32>, vector<8x16xf32>, vector<8x16xf32>, vector<8x16xf32>, vector<8x16xf32>, vector<8x16xf32>, vector<8x16xf32>, vector<8x16xf32> -> vector<8x128xf32>
    %c0_11 = arith.constant 0 : index
    %c0_12 = arith.constant 0 : index
    %c0_13 = arith.constant 0 : index
    %47 = vector.load %arg4[%c0_11, %c0_12, %c0_13] : memref<1x8x128xf32, #tpu.memory_space<vmem>>, vector<1x8x128xf32>
    %48 = vector.shape_cast %47 : vector<1x8x128xf32> to vector<8x128xf32>
    %49 = vector.shape_cast %46 : vector<8x128xf32> to vector<1x8x128xf32>
    tpu.vector_store %arg4[%c0_11, %c0_12, %c0_13], %49 {strides = array<i32>} : memref<1x8x128xf32, #tpu.memory_space<vmem>>, vector<1x8x128xf32>,
    return
  }
  func.func @transform_0(%arg0: i32) -> (i32, i32, i32) {
    %c0_i32 = arith.constant 0 : i32
    %c0_i32_0 = arith.constant 0 : i32
    %c0_i32_1 = arith.constant 0 : i32
    return %arg0, %c0_i32, %c0_i32_0 : i32, i32, i32
  }
  func.func @transform_1(%arg0: i32) -> (i32, i32) {
    %c0_i32 = arith.constant 0 : i32
    %c0_i32_0 = arith.constant 0 : i32
    %c0_i32_1 = arith.constant 0 : i32
    return %c0_i32, %c0_i32_0 : i32, i32
  }
  func.func @transform_2(%arg0: i32) -> (i32, i32) {
    %c0_i32 = arith.constant 0 : i32
    %c0_i32_0 = arith.constant 0 : i32
    %c0_i32_1 = arith.constant 0 : i32
    return %c0_i32, %c0_i32_0 : i32, i32
  }
  func.func @transform_3(%arg0: i32) -> (i32, i32, i32) {
    %c0_i32 = arith.constant 0 : i32
    %c0_i32_0 = arith.constant 0 : i32
    %c0_i32_1 = arith.constant 0 : i32
    return %arg0, %c0_i32, %c0_i32_0 : i32, i32, i32
  }
}

</mosaic_0001>

<llo_original>
// kernel: tpu_custom_call.1
$region0: #{tpu_custom_call.1}
  #allocation0 [shape = 'u32[]', space=smem, size = 0x4, offset = 0x4, fixed_abs, tag = 'smem constant byte address 0x4 - core index']
  #allocation1 [shape = 'u32[144,128]{1,0:T(1,128)}', space=vmem, size = 0x12000, scoped, tag = 'internal scratch']
  %s0 = inlined_call_operand.hbm [shape: f32[2,4,256], index: 0, kind: input, shape index: {}]
  %s1 = inlined_call_operand.vmem [shape: f32[8,12], index: 1, kind: input, shape index: {}]
  %s2 = inlined_call_operand.vmem [shape: f32[8,3], index: 2, kind: input, shape index: {}]
  %s3 = inlined_call_operand.hbm [shape: f32[2,8,128], index: 3, kind: output, shape index: {}]
  %s4 = sld [smem:[#allocation0]]
  $region49: #{tpu_custom_call.1} parent=0
    _
  %s6 = ssub.s32 1, %s4
  %s7 = scalar_select 0, %s6, %s4
  $region1: #{tpu_custom_call.1} parent=0
    #allocation2 [shape = 'u8[8192]{0}', space=vmem, size = 0x2000, scoped, tag = 'input window, operand 0']
    #allocation3 [shape = 's32[2]{0}', space=sflag, size = 0x8, scoped, tag = 'scoped memory for tpu_custom_call.1']
    #allocation4 [shape = 's32[2]{0}', space=sflag, size = 0x8, scoped, tag = 'scoped memory for tpu_custom_call.1']
    #allocation5 [shape = 'u8[8192]{0}', space=vmem, size = 0x2000, scoped, tag = 'output window, operand 0']
    %8 = vsyncpa [#allocation3], 0
    %s9 = scalar_lea.sflag [#allocation3], 1
    %10 = vsyncpa %s9, 0
    %11 = vsyncpa [#allocation4], 0
    %s12 = scalar_lea.sflag [#allocation4], 1
    %13 = vsyncpa %s12, 0
    loop: start=0, step=1, limit=4
    $region2: #{tpu_custom_call.1} parent=1 // loop_pre_header
      _
    $region3: #{tpu_custom_call.1} parent=1 // loop_header
      %s15 = sphi 0, %s19
      %p16 = scmp.ge.s32.totalorder %s15, 4
      %s25 = sphi 0, %s27
      %s28 = sphi 0, %s25
      %s29 = sphi 0, %s28
      %s45 = sphi 0, %s29
      %s49 = sphi 0, %s49
      %s51 = sphi 0, %s49
      %s52 = sphi 0, %s51
      %s66 = sphi 0, %s52
      %s70 = sphi 0, %s70
      %s72 = sphi 0, %s70
      %s73 = sphi 0, %s72
      %s87 = sphi 0, %s73
      %s93 = sphi 0, %s95
      %s96 = sphi 0, %s93
      %s97 = sphi 0, %s96
      %s113 = sphi 0, %s97
    $region4: #{tpu_custom_call.1} parent=1 // loop_header_branch
      %18 = sbr.rel (%p16) target = $region8
    $region5: #{tpu_custom_call.1} parent=1 // loop_body
      %s20 = ssub.s32 %s15, 1
      %s21 = ssub.s32 %s15, 2
      %s22 = sadd.s32 %s15, 1
      %s23 = ssub.s32 %s15, %s22
      %p24 = scmp.eq.s32.totalorder %s23, 0
      %s26 = sadd.s32 %s25, 1
      %s27 = scalar_select %p24, %s25, %s26
      %p30 = pneg %p24
      %p31 = scmp.eq.s32.totalorder %s15, 1
      %p32 = por %p30, %p31
      %p33 = scmp.ne.s32.totalorder %s25, %s28
      %p34 = scmp.eq.s32.totalorder %s15, 0
      %p35 = por %p33, %p34
      %p36 = scmp.ne.s32.totalorder %s25, %s28
      %p37 = scmp.eq.s32.totalorder %s20, 1
      %p38 = por %p36, %p37
      %p39 = scmp.ne.s32.totalorder %s28, %s29
      %p40 = scmp.eq.s32.totalorder %s20, 0
      %p41 = por %p39, %p40
      %p42 = scmp.ne.s32.totalorder %s28, %s29
      %p43 = scmp.eq.s32.totalorder %s21, 1
      %p44 = por %p42, %p43
      %p46 = scmp.ne.s32.totalorder %s29, %s45
      %p47 = scmp.eq.s32.totalorder %s21, 0
      %p48 = por %p46, %p47
      %s50 = sadd.s32 %s49, 1
      %p53 = scmp.eq.s32.totalorder %s15, 1
      %p54 = scmp.ne.s32.totalorder %s49, %s51
      %p55 = scmp.eq.s32.totalorder %s15, 0
      %p56 = por %p54, %p55
      %p57 = scmp.ne.s32.totalorder %s49, %s51
      %p58 = scmp.eq.s32.totalorder %s20, 1
      %p59 = por %p57, %p58
      %p60 = scmp.ne.s32.totalorder %s51, %s52
      %p61 = scmp.eq.s32.totalorder %s20, 0
      %p62 = por %p60, %p61
      %p63 = scmp.ne.s32.totalorder %s51, %s52
      %p64 = scmp.eq.s32.totalorder %s21, 1
      %p65 = por %p63, %p64
      %p67 = scmp.ne.s32.totalorder %s52, %s66
      %p68 = scmp.eq.s32.totalorder %s21, 0
      %p69 = por %p67, %p68
      %s71 = sadd.s32 %s70, 1
      %p74 = scmp.eq.s32.totalorder %s15, 1
      %p75 = scmp.ne.s32.totalorder %s70, %s72
      %p76 = scmp.eq.s32.totalorder %s15, 0
      %p77 = por %p75, %p76
      %p78 = scmp.ne.s32.totalorder %s70, %s72
      %p79 = scmp.eq.s32.totalorder %s20, 1
      %p80 = por %p78, %p79
      %p81 = scmp.ne.s32.totalorder %s72, %s73
      %p82 = scmp.eq.s32.totalorder %s20, 0
      %p83 = por %p81, %p82
      %p84 = scmp.ne.s32.totalorder %s72, %s73
      %p85 = scmp.eq.s32.totalorder %s21, 1
      %p86 = por %p84, %p85
      %p88 = scmp.ne.s32.totalorder %s73, %s87
      %p89 = scmp.eq.s32.totalorder %s21, 0
      %p90 = por %p88, %p89
      %s91 = ssub.s32 %s15, %s22
      %p92 = scmp.eq.s32.totalorder %s91, 0
      %s94 = sadd.s32 %s93, 1
      %s95 = scalar_select %p92, %s93, %s94
      %p98 = pneg %p92
      %p99 = scmp.eq.s32.totalorder %s15, 1
      %p100 = por %p98, %p99
      %p101 = scmp.ne.s32.totalorder %s93, %s96
      %p102 = scmp.eq.s32.totalorder %s15, 0
      %p103 = por %p101, %p102
      %p104 = scmp.ne.s32.totalorder %s93, %s96
      %p105 = scmp.eq.s32.totalorder %s20, 1
      %p106 = por %p104, %p105
      %p107 = scmp.ne.s32.totalorder %s96, %s97
      %p108 = scmp.eq.s32.totalorder %s20, 0
      %p109 = por %p107, %p108
      %p110 = scmp.ne.s32.totalorder %s96, %s97
      %p111 = scmp.eq.s32.totalorder %s21, 1
      %p112 = por %p110, %p111
      %p114 = scmp.ne.s32.totalorder %s97, %s113
      %p115 = scmp.eq.s32.totalorder %s21, 0
      %p116 = por %p114, %p115
      %p117 = scmp.le.s32.totalorder 1, %s15
      %p118 = scmp.lt.s32.totalorder %s15, 3
      %p119 = pnand %p117, %p118
      %p120 = pneg %p119
      // Predicated region
      $region9: #{tpu_custom_call.1} parent=5 // pred_check
        _
      $region10: #{tpu_custom_call.1} parent=5 // pred_check_branch
        %122 = sbr.rel (%p119) target = $region12
      $region11: #{tpu_custom_call.1} parent=5 // pred_region
        %s123 = ssub.s32 %s15, 1
        // Predicated region
        $region13: #{tpu_custom_call.1} parent=11 // pred_check
          %p124 = pneg %p62
        $region14: #{tpu_custom_call.1} parent=11 // pred_check_branch
          %126 = sbr.rel (%p124) target = $region16
        $region15: #{tpu_custom_call.1} parent=11 // pred_region
          _
        $region16: #{tpu_custom_call.1} parent=11 // pred_fallthru
          _
        // Predicated region
        $region17: #{tpu_custom_call.1} parent=11 // pred_check
          %p127 = pneg %p83
        $region18: #{tpu_custom_call.1} parent=11 // pred_check_branch
          %129 = sbr.rel (%p127) target = $region20
        $region19: #{tpu_custom_call.1} parent=11 // pred_region
          _
        $region20: #{tpu_custom_call.1} parent=11 // pred_fallthru
          _
      $region12: #{tpu_custom_call.1} parent=5 // pred_fallthru
        _
      %p130 = scmp.lt.s32.totalorder %s15, 2
      // Predicated region
      $region21: #{tpu_custom_call.1} parent=5 // pred_check
        %p131 = pneg %p130
      $region22: #{tpu_custom_call.1} parent=5 // pred_check_branch
        %133 = sbr.rel (%p131) target = $region24
      $region23: #{tpu_custom_call.1} parent=5 // pred_region
        // Predicated region
        $region25: #{tpu_custom_call.1} parent=23 // pred_check
          %p134 = pneg %p35
        $region26: #{tpu_custom_call.1} parent=23 // pred_check_branch
          %136 = sbr.rel (%p134) target = $region28
        $region27: #{tpu_custom_call.1} parent=23 // pred_region
          %s137 = sand.u32 %s25, 1
          %s138 = scalar_lea.sflag [#allocation3], %s137
          %s139 = sand.u32 %s25, 1
          %s140 = smul.addr %s139, 8
          %s141 = scalar_lea.vmem [#allocation2], %s140
          %s143 = ssub.s32 128, 128
          %144 = vsyncadd %s138, %s143
          %s145 = smul.addr %s15, 2
          %s146 = smul.addr %s145, 64
          %s147 = scalar_lea.hbm %s0, %s146
          %s149 = sshll.u32 %s141, 4
          %s150 = int_to_ptr.vmem [resolvable:$true] %s149
          %152 = dma.hbm_to_vmem [thread:$0]  %s147, 128, %s150, %s138
        $region28: #{tpu_custom_call.1} parent=23 // pred_fallthru
          _
      $region24: #{tpu_custom_call.1} parent=5 // pred_fallthru
        _
      %p153 = scmp.le.s32.totalorder 1, %s15
      %p154 = scmp.lt.s32.totalorder %s15, 3
      %p155 = pnand %p153, %p154
      %p156 = pneg %p155
      // Predicated region
      $region29: #{tpu_custom_call.1} parent=5 // pred_check
        _
      $region30: #{tpu_custom_call.1} parent=5 // pred_check_branch
        %158 = sbr.rel (%p155) target = $region32
      $region31: #{tpu_custom_call.1} parent=5 // pred_region
        %s159 = ssub.s32 %s15, 1
        %s160 = sand.u32 %s28, 1
        %s161 = scalar_lea.sflag [#allocation3], %s160
        %s162 = sand.u32 %s28, 1
        %s163 = smul.addr %s162, 8
        %s164 = scalar_lea.vmem [#allocation2], %s163
        // Predicated region
        $region33: #{tpu_custom_call.1} parent=31 // pred_check
          %p165 = pneg %p41
        $region34: #{tpu_custom_call.1} parent=31 // pred_check_branch
          %167 = sbr.rel (%p165) target = $region36
        $region35: #{tpu_custom_call.1} parent=31 // pred_region
          %168 = dma.done %s161, 128
        $region36: #{tpu_custom_call.1} parent=31 // pred_fallthru
          _
        %s169 = sand.u32 %s28, 1
        %s170 = scalar_lea.sflag [#allocation3], %s169
        %s171 = sand.u32 %s28, 1
        %s172 = smul.addr %s171, 8
        %s173 = scalar_lea.vmem [#allocation2], %s172
        %p174 = pneg %p41
        %p175 = pneg %p38
        %p176 = pneg %p62
        %p177 = pneg %p59
        %p178 = pneg %p83
        %p179 = pneg %p80
        %p180 = pneg %p109
        %p181 = pneg %p106
        %s182 = sand.u32 %s96, 1
        %s183 = scalar_lea.sflag [#allocation4], %s182
        %s184 = sand.u32 %s96, 1
        %s185 = smul.addr %s184, 8
        %s186 = scalar_lea.vmem [#allocation5], %s185
        %v187 = vld [vmem:[%s1] sm:$0xff]
        %v188 = vld [vmem:[%s2] sm:$0xff]
        %v189 = vld [vmem:[%s164] sm:$0xff]
        %v191 = vcombine.high %v189, %v189
        %192 = vrot.lane.b32.xlu0 %v189, 16
        %v193 = vpop.permute.xlu0 %192
        %194 = vrot.lane.b32.xlu0 %v191, 16
        %v195 = vpop.permute.xlu0 %194
        %vm196 = vcmask 130048
        %v197 = vsel %vm196, %v193, %v195
        %v200 = vsel %vm196, 0.0, %v193
        %201 = vrot.lane.b32.xlu0 %v189, 112
        %v202 = vpop.permute.xlu0 %201
        %203 = vrot.lane.b32.xlu0 %v191, 112
        %v204 = vpop.permute.xlu0 %203
        %vm205 = vcmask 916480
        %v206 = vsel %vm205, %v202, %v204
        %v208 = vsel %vm205, %v204, 0.0
        %v209 = vcombine.low %v189, %v189
        %vm211 = vcmask 1043456
        %v212 = vsel %vm211, %v200, %v209
        %v213 = vsel %vm211, %v197, %v189
        %215 = vset.pattern.permute.xlu0 0
        %216 = vperm.xlu0 %215, %v188
        %v217 = vpop.permute.xlu0 %216
        %vm219 = vcmask 97280
        %v221 = vsel %vm219, %v187, 0
        %v223 = vsel %vm211, %v206, 0
        %v226 = vsel %vm211, %v208, 0
        %228 = vmatprep.subr.mxu0 0.0
        %229 = vmatpush1.msra.mxu0 0.0
        %230 = vmatprep.subr.mxu0 0.0
        %231 = vmatpush1.msra.mxu0 0.0
        %232 = vmatprep.subr.mxu0 0.0
        %233 = vmatpush1.msra.mxu0 0.0
        %234 = vmatprep.subr.mxu0 0.0
        %235 = vmatpush1.msra.mxu0 0.0
        %236 = vmatprep.subr.mxu0 0.0
        %237 = vmatpush1.msra.mxu0 0.0
        %238 = vmatprep.subr.mxu0 0.0
        %239 = vmatpush1.msra.mxu0 0.0
        %240 = vmatprep.subr.mxu0 0.0
        %241 = vmatpush1.msra.mxu0 0.0
        %242 = vmatprep.subr.mxu0 0.0
        %243 = vmatpush1.msra.mxu0 0.0
        %244 = vmatprep.subr.mxu0 0.0
        %245 = vmatpush1.msra.mxu0 0.0
        %246 = vmatprep.subr.mxu0 0.0
        %247 = vmatpush1.msra.mxu0 0.0
        %248 = vmatprep.subr.mxu0 0.0
        %249 = vmatpush1.msra.mxu0 0.0
        %250 = vmatprep.subr.mxu0 0.0
        %251 = vmatpush1.msra.mxu0 0.0
        %252 = vmatprep.subr.mxu0 0.0
        %253 = vmatpush1.msra.mxu0 0.0
        %254 = vmatprep.subr.mxu0 0.0
        %255 = vmatpush1.msra.mxu0 0.0
        %256 = vmatprep.subr.mxu0 %v226
        %257 = vmatpush1.msra.mxu0 %v223
        %258 = vmatprep.subr.mxu0 %v213
        %259 = vmatpush1.msra.mxu0 %v212
        %260 = vmatprep.subr.mxu0 0.0
        %261 = vmatpush2.msra.mxu0 0.0
        %262 = vmatprep.subr.mxu0 0.0
        %263 = vmatpush2.msra.mxu0 0.0
        %264 = vmatprep.subr.mxu0 0.0
        %265 = vmatpush2.msra.mxu0 0.0
        %266 = vmatprep.subr.mxu0 0.0
        %267 = vmatpush2.msra.mxu0 0.0
        %268 = vmatprep.subr.mxu0 0.0
        %269 = vmatpush2.msra.mxu0 0.0
        %270 = vmatprep.subr.mxu0 0.0
        %271 = vmatpush2.msra.mxu0 0.0
        %272 = vmatprep.subr.mxu0 0.0
        %273 = vmatpush2.msra.mxu0 0.0
        %274 = vmatprep.subr.mxu0 0.0
        %275 = vmatpush2.msra.mxu0 0.0
        %276 = vmatprep.subr.mxu0 0.0
        %277 = vmatpush2.msra.mxu0 0.0
        %278 = vmatprep.subr.mxu0 0.0
        %279 = vmatpush2.msra.mxu0 0.0
        %280 = vmatprep.subr.mxu0 0.0
        %281 = vmatpush2.msra.mxu0 0.0
        %282 = vmatprep.subr.mxu0 0.0
        %283 = vmatpush2.msra.mxu0 0.0
        %284 = vmatprep.subr.mxu0 0.0
        %285 = vmatpush2.msra.mxu0 0.0
        %286 = vmatprep.subr.mxu0 0.0
        %287 = vmatpush2.msra.mxu0 0.0
        %288 = vmatprep.subr.mxu0 0.0
        %289 = vmatpush2.msra.mxu0 0.0
        %290 = vmatprep.subr.mxu0 0.0
        %291 = vmatpush2.msra.mxu0 0.0
        %292 = vmatprep.mubr.f32.mxu0 0.0
        %293 = vmatmul.mubr.f32.gmra.mxu0 %v221
        %v294 = vpop.f32.mrf.mxu0
        %v295 = vadd.f32 %v217, %v294
        %v296 = vpop.f32.mrf.mxu0
        %v297 = vadd.f32 %v217, %v296
        %298 = vdwg.mxu0
        %v299 = vmax.f32 %v295, 0.0
        %v300 = vmax.f32 %v297, 0.0
        %301 = vset.pattern.permute.xlu0 1
        %302 = vperm.xlu0 %301, %v188
        %v303 = vpop.permute.xlu0 %302
        %v305 = vmul.f32 %v299, %v303
        %v306 = vmul.f32 %v300, %v303
        %307 = vset.pattern.permute.xlu0 2
        %308 = vperm.xlu0 %307, %v188
        %v309 = vpop.permute.xlu0 %308
        %v311 = vadd.f32 %v305, %v309
        %v312 = vadd.f32 %v306, %v309
        %314 = vrot.lane.b32.xlu0 %v311, 112
        %v315 = vpop.permute.xlu0 %314
        %v317 = vmax.f32 %v311, %v315
        %319 = vrot.lane.b32.xlu0 %v312, 112
        %v320 = vpop.permute.xlu0 %319
        %v322 = vmax.f32 %v312, %v320
        %324 = vrot.lane.b32.xlu0 %v317, 112
        %v325 = vpop.permute.xlu0 %324
        %327 = vrot.lane.b32.xlu0 %v317, 96
        %v328 = vpop.permute.xlu0 %327
        %330 = vrot.lane.b32.xlu0 %v317, 80
        %v331 = vpop.permute.xlu0 %330
        %334 = vrot.lane.b32.xlu0 %v322, 64
        %v335 = vpop.permute.xlu0 %334
        %337 = vrot.lane.b32.xlu0 %v322, 48
        %v338 = vpop.permute.xlu0 %337
        %340 = vrot.lane.b32.xlu0 %v322, 32
        %v341 = vpop.permute.xlu0 %340
        %343 = vrot.lane.b32.xlu0 %v322, 16
        %v344 = vpop.permute.xlu0 %343
        %v346 = vsel %vm196, %v317, %v325
        %vm347 = vcmask 261120
        %v348 = vsel %vm347, %v346, %v328
        %vm349 = vcmask 392192
        %v350 = vsel %vm349, %v348, %v331
        %vm351 = vcmask 523264
        %v352 = vsel %vm351, %v350, %v335
        %vm353 = vcmask 654336
        %v354 = vsel %vm353, %v352, %v338
        %vm355 = vcmask 785408
        %v356 = vsel %vm355, %v354, %v341
        %v357 = vsel %vm205, %v356, %v344
        %358 = vst [vmem:[%s186] sm:$0xff] %v357
        %s359 = sand.u32 %s96, 1
        %s360 = scalar_lea.sflag [#allocation4], %s359
        %s361 = sand.u32 %s96, 1
        %s362 = smul.addr %s361, 8
        %s363 = scalar_lea.vmem [#allocation5], %s362
        // Predicated region
        $region37: #{tpu_custom_call.1} parent=31 // pred_check
          %p364 = pneg %p106
        $region38: #{tpu_custom_call.1} parent=31 // pred_check_branch
          %366 = sbr.rel (%p364) target = $region40
        $region39: #{tpu_custom_call.1} parent=31 // pred_region
          %s368 = ssub.s32 128, 128
          %369 = vsyncadd %s360, %s368
          %s370 = smul.addr %s20, 128
          %s371 = scalar_lea.hbm %s3, %s370
          %s373 = sshll.u32 %s363, 4
          %s374 = int_to_ptr.vmem [resolvable:$true] %s373
          %376 = dma.vmem_to_hbm [thread:$0]  %s374, 128, %s371, %s360
        $region40: #{tpu_custom_call.1} parent=31 // pred_fallthru
          _
      $region32: #{tpu_custom_call.1} parent=5 // pred_fallthru
        _
      %p377 = scmp.le.s32.totalorder 2, %s15
      // Predicated region
      $region41: #{tpu_custom_call.1} parent=5 // pred_check
        %p378 = pneg %p377
      $region42: #{tpu_custom_call.1} parent=5 // pred_check_branch
        %380 = sbr.rel (%p378) target = $region44
      $region43: #{tpu_custom_call.1} parent=5 // pred_region
        %s381 = ssub.s32 %s15, 2
        // Predicated region
        $region45: #{tpu_custom_call.1} parent=43 // pred_check
          %p382 = pneg %p112
        $region46: #{tpu_custom_call.1} parent=43 // pred_check_branch
          %384 = sbr.rel (%p382) target = $region48
        $region47: #{tpu_custom_call.1} parent=43 // pred_region
          %s385 = sand.u32 %s97, 1
          %s386 = scalar_lea.sflag [#allocation4], %s385
          %s387 = sand.u32 %s97, 1
          %s388 = smul.addr %s387, 8
          %s389 = scalar_lea.vmem [#allocation5], %s388
          %390 = dma.done %s386, 128
        $region48: #{tpu_custom_call.1} parent=43 // pred_fallthru
          _
      $region44: #{tpu_custom_call.1} parent=5 // pred_fallthru
        _
    $region6: #{tpu_custom_call.1} parent=1 // loop_footer
      %s19 = sadd.s32 1, %s15
    $region7: #{tpu_custom_call.1} parent=1 // loop_footer_branch
      %14 = sbr.rel target = $region3
    $region8: #{tpu_custom_call.1} parent=1 // loop_exit
      _
    %391 = vsyncpa [#allocation3], 1
    %s392 = scalar_lea.sflag [#allocation3], 1
    %393 = vsyncpa %s392, 1
    %394 = vsyncpa [#allocation4], 1
    %s395 = scalar_lea.sflag [#allocation4], 1
    %396 = vsyncpa %s395, 1

</llo_original>
